<compile_context>
chip_gen: v5e
topology: v5e:2x2
jax: 0.10.0
libtpu: 0.0.40
codegen_flags: <defaults>
</compile_context>

<pallas_src>
import functools

import jax
import jax.numpy as jnp
from jax.experimental import pallas as pl
from jax.experimental.pallas import tpu as pltpu

MARGIN = 1.0
EPS = 1e-6  # matches torch.nn.functional.pairwise_distance default eps


def _round_up(x, m):
    return ((x + m - 1) // m) * m


def _choose_batch_tile(batch, d_in, hidden, d_z, in_itemsize):
    """Pick the batch-tile rows per grid step from a VMEM budget (not a tiny constant)."""
    # VMEM per batch row: double-buffered a/p/n input blocks + f32 concat/h/z intermediates.
    bytes_per_row = 2 * 3 * d_in * in_itemsize + 3 * (d_in + 2 * hidden + d_z) * 4
    vmem_budget = 24 << 20                      # stays under v7x's ~32 MiB scoped default
    tb = min(1024, max(8, vmem_budget // bytes_per_row))
    bp8 = _round_up(batch, 8)
    if bp8 >= 16:
        # Keep >= 2 grid steps so the "parallel" batch axis can shard across v7x's 2 cores.
        tb = min(tb, _round_up(pl.cdiv(bp8, 2), 8))
    tb = max(8, (min(tb, bp8) // 8) * 8)        # sublane-aligned (layout invariant below)
    return tb


def _siamese_triplet_kernel(a_ref, p_ref, n_ref, w1_ref, b1_ref, w2_ref, b2_ref,
                            out_ref, *, batch, bf16_matmul):
    """One grid step: encode a/p/n tiles and emit one masked partial loss sum."""
    tb = a_ref.shape[0]

    # One (3*TB, D) slab in VMEM -> a single MXU matmul per encoder layer.
    # tb % 8 == 0 keeps the concat / row-slices tile-aligned (layout-preserving).
    x = jnp.concatenate([a_ref[...], p_ref[...], n_ref[...]], axis=0)
    if bf16_matmul:
        x = x.astype(jnp.bfloat16)              # in-kernel operand cast (no HBM cast pass)

    h = jnp.dot(x, w1_ref[...], preferred_element_type=jnp.float32) + b1_ref[...]
    h = jnp.maximum(h, 0.0)                     # ReLU in f32
    h = h.astype(w2_ref.dtype)                  # bf16 MXU operands when requested
    z = jnp.dot(h, w2_ref[...], preferred_element_type=jnp.float32) + b2_ref[...]

    za = z[0 * tb:1 * tb, :]
    zp = z[1 * tb:2 * tb, :]
    zn = z[2 * tb:3 * tb, :]

    # TripletMarginLoss(margin=1, p=2), PyTorch pairwise_distance semantics: ||a - p + eps||_2.
    d_ap = jnp.sqrt(jnp.sum(jnp.square(za - zp + EPS), axis=-1, keepdims=True))
    d_an = jnp.sqrt(jnp.sum(jnp.square(za - zn + EPS), axis=-1, keepdims=True))
    per_sample = jnp.maximum(d_ap - d_an + MARGIN, 0.0)            # (TB, 1) f32

    # Mask rows beyond the true batch (batch zero-padded to a TB multiple), then emit a
    # single per-tile partial sum -> disjoint scalar output blocks, no lane-sparse stores.
    row = pl.program_id(0) * tb + jax.lax.broadcasted_iota(jnp.int32, (tb, 1), 0)
    masked = jnp.where(row < batch, per_sample, 0.0)
    out_ref[...] = jnp.sum(masked, axis=0, keepdims=True).reshape(out_ref.shape)


def siamese_net_loss(anchor, positive, negative, params, *, use_bf16_matmul=True):
    """anchor/positive/negative: (B, D_in) float32.  Returns the scalar triplet loss."""
    w1, b1, w2, b2 = params
    B, D = anchor.shape
    H = w1.shape[1]
    Dz = w2.shape[1]

    tb = _choose_batch_tile(B, D, H, Dz, jnp.dtype(anchor.dtype).itemsize)
    bp = _round_up(B, tb)
    if bp != B:                                 # pad only when the tile does not divide B
        pad = ((0, bp - B), (0, 0))
        anchor = jnp.pad(anchor, pad)
        positive = jnp.pad(positive, pad)
        negative = jnp.pad(negative, pad)
    num_tiles = bp // tb

    if use_bf16_matmul:
        # bf16 MXU operands on all chips (v5e MXU is bf16-native).  Only the tiny pinned
        # weights are cast here; activation blocks are cast in-kernel.
        w1 = w1.astype(jnp.bfloat16)
        w2 = w2.astype(jnp.bfloat16)
    b1 = b1.astype(jnp.float32).reshape(1, H)
    b2 = b2.astype(jnp.float32).reshape(1, Dz)

    in_itemsize = jnp.dtype(anchor.dtype).itemsize
    w_itemsize = jnp.dtype(w1.dtype).itemsize
    cost = pl.CostEstimate(
        flops=2 * 3 * bp * (D * H + H * Dz),
        transcendentals=2 * bp,                 # the two sqrt's per sample
        bytes_accessed=(3 * bp * D) * in_itemsize
        + (D * H + H * Dz) * w_itemsize + (H + Dz) * 4 + num_tiles * 4,
    )

    partial = pl.pallas_call(
        functools.partial(_siamese_triplet_kernel, batch=B,
                          bf16_matmul=use_bf16_matmul),
        out_shape=jax.ShapeDtypeStruct((num_tiles, 1, 1), jnp.float32),
        grid_spec=pl.GridSpec(
            grid=(num_tiles,),
            in_specs=[
                pl.BlockSpec((tb, D), lambda i: (i, 0)),     # anchor   (streamed)
                pl.BlockSpec((tb, D), lambda i: (i, 0)),     # positive (streamed)
                pl.BlockSpec((tb, D), lambda i: (i, 0)),     # negative (streamed)
                pl.BlockSpec((D, H), lambda i: (0, 0)),      # pinned weights / biases
                pl.BlockSpec((1, H), lambda i: (0, 0)),
                pl.BlockSpec((H, Dz), lambda i: (0, 0)),
                pl.BlockSpec((1, Dz), lambda i: (0, 0)),
            ],
            out_specs=pl.BlockSpec((1, 1, 1), lambda i: (i, 0, 0)),
        ),
        compiler_params=pltpu.CompilerParams(
            # Disjoint output blocks per grid step -> safe to shard across v7x cores.
            dimension_semantics=("parallel",)),
        cost_estimate=cost,
    )(anchor, positive, negative, w1, b1, w2, b2)

    # Per-tile partial sums (padded rows contributed 0); mean over the true batch.
    return jnp.sum(partial) / B


def reference_loss(anchor, positive, negative, params):
    w1, b1, w2, b2 = params

    def encode(x):
        h = jnp.maximum(x @ w1 + b1, 0.0)
        return h @ w2 + b2

    za, zp, zn = encode(anchor), encode(positive), encode(negative)
    d_ap = jnp.sqrt(jnp.sum((za - zp + EPS) ** 2, axis=-1))
    d_an = jnp.sqrt(jnp.sum((za - zn + EPS) ** 2, axis=-1))
    return jnp.mean(jnp.maximum(d_ap - d_an + MARGIN, 0.0))


if __name__ == "__main__":
    # Small but lane-dense shapes: batch=48 (exercises the >=2-grid-step split: two 24-row
    # tiles, no padding), flattened input dim 128 (e.g. 2x8x8 NCHW), hidden 128, latent 128.
    B, D_in, H, D_z = 48, 128, 128, 128

    key = jax.random.PRNGKey(0)
    ka, kp, kn, kw1, kb1, kw2, kb2 = jax.random.split(key, 7)

    anchor = jax.random.normal(ka, (B, D_in), dtype=jnp.float32)
    positive = jax.random.normal(kp, (B, D_in), dtype=jnp.float32)
    negative = jax.random.normal(kn, (B, D_in), dtype=jnp.float32)

    # Deterministic synthetic encoder parameters.
    w1 = jax.random.normal(kw1, (D_in, H), dtype=jnp.float32) * 0.05
    b1 = jax.random.normal(kb1, (1, H), dtype=jnp.float32) * 0.05
    w2 = jax.random.normal(kw2, (H, D_z), dtype=jnp.float32) * 0.05
    b2 = jax.random.normal(kb2, (1, D_z), dtype=jnp.float32) * 0.05
    params = (w1, b1, w2, b2)

    ref = jax.block_until_ready(reference_loss(anchor, positive, negative, params))

    # f32 MXU path: tight match against the pure-JAX reference.
    loss_f32 = jax.block_until_ready(
        siamese_net_loss(anchor, positive, negative, params, use_bf16_matmul=False))
    assert jnp.allclose(loss_f32, ref, rtol=1e-4, atol=1e-4), (loss_f32, ref)

    # bf16 MXU operands (recommended default on v5e/v6e/v7x), f32 accumulation.
    loss_bf16 = jax.block_until_ready(
        siamese_net_loss(anchor, positive, negative, params, use_bf16_matmul=True))
    assert jnp.allclose(loss_bf16, ref, rtol=0.1, atol=0.1), (loss_bf16, ref)

    print("KERNEL_OK")
</pallas_src>

<mosaic_0001>
module attributes {stable_mosaic.version = 11 : i64} {
  func.func @_siamese_triplet_kernel(%arg0: i32, %arg1: memref<24x128xf32, #tpu.memory_space<vmem>>, %arg2: memref<24x128xf32, #tpu.memory_space<vmem>>, %arg3: memref<24x128xf32, #tpu.memory_space<vmem>>, %arg4: memref<128x128xf32, #tpu.memory_space<vmem>>, %arg5: memref<1x128xf32, #tpu.memory_space<vmem>>, %arg6: memref<128x128xf32, #tpu.memory_space<vmem>>, %arg7: memref<1x128xf32, #tpu.memory_space<vmem>>, %arg8: memref<1x1x1xf32, #tpu.memory_space<vmem>>) attributes {dimension_semantics = [#tpu.dimension_semantics<parallel>], iteration_bounds = array<i64: 2>, scalar_prefetch = 0 : i64, scratch_operands = 0 : i64, tpu.core_type = #tpu.core_type<tc>, window_params = [{transform_indices = @transform_0, window_bounds = array<i64: 24, 128>}, {transform_indices = @transform_1, window_bounds = array<i64: 24, 128>}, {transform_indices = @transform_2, window_bounds = array<i64: 24, 128>}, {pipeline_mode = #tpu.pipeline_mode<synchronous>, transform_indices = @transform_3, window_bounds = array<i64: 128, 128>}, {pipeline_mode = #tpu.pipeline_mode<synchronous>, transform_indices = @transform_4, window_bounds = array<i64: 1, 128>}, {pipeline_mode = #tpu.pipeline_mode<synchronous>, transform_indices = @transform_5, window_bounds = array<i64: 128, 128>}, {pipeline_mode = #tpu.pipeline_mode<synchronous>, transform_indices = @transform_6, window_bounds = array<i64: 1, 128>}, {transform_indices = @transform_7, window_bounds = array<i64: 1, 1, 1>}]} {
    %c0 = arith.constant 0 : index
    %c0_0 = arith.constant 0 : index
    %0 = vector.load %arg1[%c0, %c0_0] : memref<24x128xf32, #tpu.memory_space<vmem>>, vector<24x128xf32>
    %c0_1 = arith.constant 0 : index
    %c0_2 = arith.constant 0 : index
    %1 = vector.load %arg2[%c0_1, %c0_2] : memref<24x128xf32, #tpu.memory_space<vmem>>, vector<24x128xf32>
    %c0_3 = arith.constant 0 : index
    %c0_4 = arith.constant 0 : index
    %2 = vector.load %arg3[%c0_3, %c0_4] : memref<24x128xf32, #tpu.memory_space<vmem>>, vector<24x128xf32>
    %3 = tpu.concatenate %0, %1, %2 in 0 : vector<24x128xf32>, vector<24x128xf32>, vector<24x128xf32> -> vector<72x128xf32>
    %c0_5 = arith.constant 0 : index
    %c0_6 = arith.constant 0 : index
    %4 = vector.load %arg4[%c0_5, %c0_6] : memref<128x128xf32, #tpu.memory_space<vmem>>, vector<128x128xf32>
    %cst = arith.constant dense<0.000000e+00> : vector<72x128xf32>
    %5 = tpu.matmul %3, %4, %cst {dimension_numbers = #tpu.dot_dimension_numbers<[1], [0], [0], [1], [0, 0, 1, 1], [], []>} : vector<72x128xf32>, vector<128x128xf32>, vector<72x128xf32> -> vector<72x128xf32>
    %c0_7 = arith.constant 0 : index
    %c0_8 = arith.constant 0 : index
    %6 = vector.load %arg5[%c0_7, %c0_8] : memref<1x128xf32, #tpu.memory_space<vmem>>, vector<1x128xf32>
    %7 = vector.broadcast %6 : vector<1x128xf32> to vector<72x128xf32>
    %8 = arith.addf %5, %7 : vector<72x128xf32>
    %cst_9 = arith.constant 0.000000e+00 : f32
    %9 = vector.broadcast %cst_9 : f32 to vector<72x128xf32>
    %10 = arith.maximumf %8, %9 : vector<72x128xf32>
    %c0_10 = arith.constant 0 : index
    %c0_11 = arith.constant 0 : index
    %11 = vector.load %arg6[%c0_10, %c0_11] : memref<128x128xf32, #tpu.memory_space<vmem>>, vector<128x128xf32>
    %cst_12 = arith.constant dense<0.000000e+00> : vector<72x128xf32>
    %12 = tpu.matmul %10, %11, %cst_12 {dimension_numbers = #tpu.dot_dimension_numbers<[1], [0], [0], [1], [0, 0, 1, 1], [], []>} : vector<72x128xf32>, vector<128x128xf32>, vector<72x128xf32> -> vector<72x128xf32>
    %c0_13 = arith.constant 0 : index
    %c0_14 = arith.constant 0 : index
    %13 = vector.load %arg7[%c0_13, %c0_14] : memref<1x128xf32, #tpu.memory_space<vmem>>, vector<1x128xf32>
    %14 = vector.broadcast %13 : vector<1x128xf32> to vector<72x128xf32>
    %15 = arith.addf %12, %14 : vector<72x128xf32>
    %16 = vector.extract_strided_slice %15 {offsets = [0, 0], sizes = [24, 128], strides = [1, 1]} : vector<72x128xf32> to vector<24x128xf32>
    %17 = vector.extract_strided_slice %15 {offsets = [24, 0], sizes = [24, 128], strides = [1, 1]} : vector<72x128xf32> to vector<24x128xf32>
    %18 = vector.extract_strided_slice %15 {offsets = [48, 0], sizes = [24, 128], strides = [1, 1]} : vector<72x128xf32> to vector<24x128xf32>
    %19 = arith.subf %16, %17 : vector<24x128xf32>
    %cst_15 = arith.constant 9.99999997E-7 : f32
    %20 = vector.broadcast %cst_15 : f32 to vector<24x128xf32>
    %21 = arith.addf %19, %20 : vector<24x128xf32>
    %22 = arith.mulf %21, %21 : vector<24x128xf32>
    %cst_16 = arith.constant dense<0.000000e+00> : vector<24xf32>
    %23 = vector.multi_reduction <add>, %22, %cst_16 [1] : vector<24x128xf32> to vector<24xf32>
    %24 = vector.shape_cast %23 : vector<24xf32> to vector<24x1xf32>
    %25 = math.sqrt %24 : vector<24x1xf32>
    %26 = arith.subf %16, %18 : vector<24x128xf32>
    %cst_17 = arith.constant 9.99999997E-7 : f32
    %27 = vector.broadcast %cst_17 : f32 to vector<24x128xf32>
    %28 = arith.addf %26, %27 : vector<24x128xf32>
    %29 = arith.mulf %28, %28 : vector<24x128xf32>
    %cst_18 = arith.constant dense<0.000000e+00> : vector<24xf32>
    %30 = vector.multi_reduction <add>, %29, %cst_18 [1] : vector<24x128xf32> to vector<24xf32>
    %31 = vector.shape_cast %30 : vector<24xf32> to vector<24x1xf32>
    %32 = math.sqrt %31 : vector<24x1xf32>
    %33 = arith.subf %25, %32 : vector<24x1xf32>
    %cst_19 = arith.constant 1.000000e+00 : f32
    %34 = vector.broadcast %cst_19 : f32 to vector<24x1xf32>
    %35 = arith.addf %33, %34 : vector<24x1xf32>
    %cst_20 = arith.constant 0.000000e+00 : f32
    %36 = vector.broadcast %cst_20 : f32 to vector<24x1xf32>
    %37 = arith.maximumf %35, %36 : vector<24x1xf32>
    %c24_i32 = arith.constant 24 : i32
    %38 = arith.muli %arg0, %c24_i32 : i32
    %39 = tpu.iota {dimensions = array<i32: 0>} : vector<24x1xi32>
    %40 = vector.broadcast %38 : i32 to vector<24x1xi32>
    %41 = arith.addi %40, %39 : vector<24x1xi32>
    %c48_i32 = arith.constant 48 : i32
    %42 = vector.broadcast %c48_i32 : i32 to vector<24x1xi32>
    %43 = arith.cmpi slt, %41, %42 : vector<24x1xi32>
    %cst_21 = arith.constant 0.000000e+00 : f32
    %44 = vector.broadcast %cst_21 : f32 to vector<24x1xf32>
    %45 = arith.select %43, %37, %44 : vector<24x1xi1>, vector<24x1xf32>
    %cst_22 = arith.constant dense<0.000000e+00> : vector<1xf32>
    %46 = vector.multi_reduction <add>, %45, %cst_22 [0] : vector<24x1xf32> to vector<1xf32>
    %47 = vector.shape_cast %46 : vector<1xf32> to vector<1x1xf32>
    %48 = vector.shape_cast %47 : vector<1x1xf32> to vector<1x1x1xf32>
    %c0_23 = arith.constant 0 : index
    %c0_24 = arith.constant 0 : index
    %c0_25 = arith.constant 0 : index
    %49 = vector.load %arg8[%c0_23, %c0_24, %c0_25] : memref<1x1x1xf32, #tpu.memory_space<vmem>>, vector<1x1x1xf32>
    tpu.vector_store %arg8[%c0_23, %c0_24, %c0_25], %48 {strides = array<i32>} : memref<1x1x1xf32, #tpu.memory_space<vmem>>, vector<1x1x1xf32>,
    return
  }
  func.func @transform_0(%arg0: i32) -> (i32, i32) {
    %c0_i32 = arith.constant 0 : i32
    %c0_i32_0 = arith.constant 0 : i32
    return %arg0, %c0_i32 : i32, i32
  }
  func.func @transform_1(%arg0: i32) -> (i32, i32) {
    %c0_i32 = arith.constant 0 : i32
    %c0_i32_0 = arith.constant 0 : i32
    return %arg0, %c0_i32 : i32, i32
  }
  func.func @transform_2(%arg0: i32) -> (i32, i32) {
    %c0_i32 = arith.constant 0 : i32
    %c0_i32_0 = arith.constant 0 : i32
    return %arg0, %c0_i32 : i32, i32
  }
  func.func @transform_3(%arg0: i32) -> (i32, i32) {
    %c0_i32 = arith.constant 0 : i32
    %c0_i32_0 = arith.constant 0 : i32
    %c0_i32_1 = arith.constant 0 : i32
    return %c0_i32, %c0_i32_0 : i32, i32
  }
  func.func @transform_4(%arg0: i32) -> (i32, i32) {
    %c0_i32 = arith.constant 0 : i32
    %c0_i32_0 = arith.constant 0 : i32
    %c0_i32_1 = arith.constant 0 : i32
    return %c0_i32, %c0_i32_0 : i32, i32
  }
  func.func @transform_5(%arg0: i32) -> (i32, i32) {
    %c0_i32 = arith.constant 0 : i32
    %c0_i32_0 = arith.constant 0 : i32
    %c0_i32_1 = arith.constant 0 : i32
    return %c0_i32, %c0_i32_0 : i32, i32
  }
  func.func @transform_6(%arg0: i32) -> (i32, i32) {
    %c0_i32 = arith.constant 0 : i32
    %c0_i32_0 = arith.constant 0 : i32
    %c0_i32_1 = arith.constant 0 : i32
    return %c0_i32, %c0_i32_0 : i32, i32
  }
  func.func @transform_7(%arg0: i32) -> (i32, i32, i32) {
    %c0_i32 = arith.constant 0 : i32
    %c0_i32_0 = arith.constant 0 : i32
    %c0_i32_1 = arith.constant 0 : i32
    return %arg0, %c0_i32, %c0_i32_0 : i32, i32, i32
  }
}

</mosaic_0001>

<llo_original>
// kernel: tpu_custom_call.1
$region0: #{tpu_custom_call.1}
  #allocation0 [shape = 'u32[]', space=smem, size = 0x4, offset = 0x4, fixed_abs, tag = 'smem constant byte address 0x4 - core index']
  #allocation1 [shape = 'u32[72,128]{1,0:T(1,128)}', space=vmem, size = 0x9000, scoped, tag = 'internal scratch']
  %s0 = inlined_call_operand.hbm [shape: f32[48,128], index: 0, kind: input, shape index: {}]
  %s1 = inlined_call_operand.hbm [shape: f32[48,128], index: 1, kind: input, shape index: {}]
  %s2 = inlined_call_operand.hbm [shape: f32[48,128], index: 2, kind: input, shape index: {}]
  %s3 = inlined_call_operand.hbm [shape: f32[128,128], index: 3, kind: input, shape index: {}]
  %s4 = inlined_call_operand.vmem [shape: f32[1,128], index: 4, kind: input, shape index: {}]
  %s5 = inlined_call_operand.hbm [shape: f32[128,128], index: 5, kind: input, shape index: {}]
  %s6 = inlined_call_operand.vmem [shape: f32[1,128], index: 6, kind: input, shape index: {}]
  %s7 = inlined_call_operand.vmem [shape: f32[2,1,1], index: 7, kind: output, shape index: {}]
  %s8 = sld [smem:[#allocation0]]
  $region81: #{tpu_custom_call.1} parent=0
    _
  %s10 = ssub.s32 1, %s8
  %s11 = scalar_select 0, %s10, %s8
  $region1: #{tpu_custom_call.1} parent=0
    #allocation2 [shape = 'u8[24576]{0}', space=vmem, size = 0x6000, scoped, tag = 'input window, operand 0']
    #allocation3 [shape = 's32[2]{0}', space=sflag, size = 0x8, scoped, tag = 'scoped memory for tpu_custom_call.1']
    #allocation4 [shape = 'u8[24576]{0}', space=vmem, size = 0x6000, scoped, tag = 'input window, operand 1']
    #allocation5 [shape = 's32[2]{0}', space=sflag, size = 0x8, scoped, tag = 'scoped memory for tpu_custom_call.1']
    #allocation6 [shape = 'u8[24576]{0}', space=vmem, size = 0x6000, scoped, tag = 'input window, operand 2']
    #allocation7 [shape = 'u8[65536]{0}', space=vmem, size = 0x10000, scoped, tag = 'input window, operand 3, single buffered']
    #allocation8 [shape = 's32[1]{0}', space=sflag, size = 0x4, scoped, tag = 'scoped memory for tpu_custom_call.1']
    #allocation9 [shape = 'u8[65536]{0}', space=vmem, size = 0x10000, scoped, tag = 'input window, operand 5, single buffered']
    %12 = vsyncpa [#allocation3], 0
    %s13 = scalar_lea.sflag [#allocation3], 1
    %14 = vsyncpa %s13, 0
    %15 = vsyncpa [#allocation5], 0
    %s16 = scalar_lea.sflag [#allocation5], 1
    %17 = vsyncpa %s16, 0
    %18 = vsyncpa [#allocation8], 0
    loop: start=0, step=1, limit=4
    $region2: #{tpu_custom_call.1} parent=1 // loop_pre_header
      _
    $region3: #{tpu_custom_call.1} parent=1 // loop_header
      %s20 = sphi 0, %s24
      %p21 = scmp.ge.s32.totalorder %s20, 4
      %s30 = sphi 0, %s32
      %s33 = sphi 0, %s30
      %s34 = sphi 0, %s33
      %s50 = sphi 0, %s34
      %s56 = sphi 0, %s58
      %s59 = sphi 0, %s56
      %s60 = sphi 0, %s59
      %s76 = sphi 0, %s60
      %s82 = sphi 0, %s84
      %s85 = sphi 0, %s82
      %s86 = sphi 0, %s85
      %s102 = sphi 0, %s86
      %s106 = sphi 0, %s106
      %s108 = sphi 0, %s106
      %s109 = sphi 0, %s108
      %s123 = sphi 0, %s109
      %s127 = sphi 0, %s127
      %s129 = sphi 0, %s127
      %s130 = sphi 0, %s129
      %s144 = sphi 0, %s130
      %s148 = sphi 0, %s148
      %s150 = sphi 0, %s148
      %s151 = sphi 0, %s150
      %s165 = sphi 0, %s151
      %s169 = sphi 0, %s169
      %s171 = sphi 0, %s169
      %s172 = sphi 0, %s171
      %s186 = sphi 0, %s172
      %s192 = sphi 0, %s194
      %s195 = sphi 0, %s192
      %s196 = sphi 0, %s195
      %s212 = sphi 0, %s196
    $region4: #{tpu_custom_call.1} parent=1 // loop_header_branch
      %23 = sbr.rel (%p21) target = $region8
    $region5: #{tpu_custom_call.1} parent=1 // loop_body
      %s25 = ssub.s32 %s20, 1
      %s26 = ssub.s32 %s20, 2
      %s27 = sadd.s32 %s20, 1
      %s28 = ssub.s32 %s20, %s27
      %p29 = scmp.eq.s32.totalorder %s28, 0
      %s31 = sadd.s32 %s30, 1
      %s32 = scalar_select %p29, %s30, %s31
      %p35 = pneg %p29
      %p36 = scmp.eq.s32.totalorder %s20, 1
      %p37 = por %p35, %p36
      %p38 = scmp.ne.s32.totalorder %s30, %s33
      %p39 = scmp.eq.s32.totalorder %s20, 0
      %p40 = por %p38, %p39
      %p41 = scmp.ne.s32.totalorder %s30, %s33
      %p42 = scmp.eq.s32.totalorder %s25, 1
      %p43 = por %p41, %p42
      %p44 = scmp.ne.s32.totalorder %s33, %s34
      %p45 = scmp.eq.s32.totalorder %s25, 0
      %p46 = por %p44, %p45
      %p47 = scmp.ne.s32.totalorder %s33, %s34
      %p48 = scmp.eq.s32.totalorder %s26, 1
      %p49 = por %p47, %p48
      %p51 = scmp.ne.s32.totalorder %s34, %s50
      %p52 = scmp.eq.s32.totalorder %s26, 0
      %p53 = por %p51, %p52
      %s54 = ssub.s32 %s20, %s27
      %p55 = scmp.eq.s32.totalorder %s54, 0
      %s57 = sadd.s32 %s56, 1
      %s58 = scalar_select %p55, %s56, %s57
      %p61 = pneg %p55
      %p62 = scmp.eq.s32.totalorder %s20, 1
      %p63 = por %p61, %p62
      %p64 = scmp.ne.s32.totalorder %s56, %s59
      %p65 = scmp.eq.s32.totalorder %s20, 0
      %p66 = por %p64, %p65
      %p67 = scmp.ne.s32.totalorder %s56, %s59
      %p68 = scmp.eq.s32.totalorder %s25, 1
      %p69 = por %p67, %p68
      %p70 = scmp.ne.s32.totalorder %s59, %s60
      %p71 = scmp.eq.s32.totalorder %s25, 0
      %p72 = por %p70, %p71
      %p73 = scmp.ne.s32.totalorder %s59, %s60
      %p74 = scmp.eq.s32.totalorder %s26, 1
      %p75 = por %p73, %p74
      %p77 = scmp.ne.s32.totalorder %s60, %s76
      %p78 = scmp.eq.s32.totalorder %s26, 0
      %p79 = por %p77, %p78
      %s80 = ssub.s32 %s20, %s27
      %p81 = scmp.eq.s32.totalorder %s80, 0
      %s83 = sadd.s32 %s82, 1
      %s84 = scalar_select %p81, %s82, %s83
      %p87 = pneg %p81
      %p88 = scmp.eq.s32.totalorder %s20, 1
      %p89 = por %p87, %p88
      %p90 = scmp.ne.s32.totalorder %s82, %s85
      %p91 = scmp.eq.s32.totalorder %s20, 0
      %p92 = por %p90, %p91
      %p93 = scmp.ne.s32.totalorder %s82, %s85
      %p94 = scmp.eq.s32.totalorder %s25, 1
      %p95 = por %p93, %p94
      %p96 = scmp.ne.s32.totalorder %s85, %s86
      %p97 = scmp.eq.s32.totalorder %s25, 0
      %p98 = por %p96, %p97
      %p99 = scmp.ne.s32.totalorder %s85, %s86
      %p100 = scmp.eq.s32.totalorder %s26, 1
      %p101 = por %p99, %p100
      %p103 = scmp.ne.s32.totalorder %s86, %s102
      %p104 = scmp.eq.s32.totalorder %s26, 0
      %p105 = por %p103, %p104
      %s107 = sadd.s32 %s106, 1
      %p110 = scmp.eq.s32.totalorder %s20, 1
      %p111 = scmp.ne.s32.totalorder %s106, %s108
      %p112 = scmp.eq.s32.totalorder %s20, 0
      %p113 = por %p111, %p112
      %p114 = scmp.ne.s32.totalorder %s106, %s108
      %p115 = scmp.eq.s32.totalorder %s25, 1
      %p116 = por %p114, %p115
      %p117 = scmp.ne.s32.totalorder %s108, %s109
      %p118 = scmp.eq.s32.totalorder %s25, 0
      %p119 = por %p117, %p118
      %p120 = scmp.ne.s32.totalorder %s108, %s109
      %p121 = scmp.eq.s32.totalorder %s26, 1
      %p122 = por %p120, %p121
      %p124 = scmp.ne.s32.totalorder %s109, %s123
      %p125 = scmp.eq.s32.totalorder %s26, 0
      %p126 = por %p124, %p125
      %s128 = sadd.s32 %s127, 1
      %p131 = scmp.eq.s32.totalorder %s20, 1
      %p132 = scmp.ne.s32.totalorder %s127, %s129
      %p133 = scmp.eq.s32.totalorder %s20, 0
      %p134 = por %p132, %p133
      %p135 = scmp.ne.s32.totalorder %s127, %s129
      %p136 = scmp.eq.s32.totalorder %s25, 1
      %p137 = por %p135, %p136
      %p138 = scmp.ne.s32.totalorder %s129, %s130
      %p139 = scmp.eq.s32.totalorder %s25, 0
      %p140 = por %p138, %p139
      %p141 = scmp.ne.s32.totalorder %s129, %s130
      %p142 = scmp.eq.s32.totalorder %s26, 1
      %p143 = por %p141, %p142
      %p145 = scmp.ne.s32.totalorder %s130, %s144
      %p146 = scmp.eq.s32.totalorder %s26, 0
      %p147 = por %p145, %p146
      %s149 = sadd.s32 %s148, 1
      %p152 = scmp.eq.s32.totalorder %s20, 1
      %p153 = scmp.ne.s32.totalorder %s148, %s150
      %p154 = scmp.eq.s32.totalorder %s20, 0
      %p155 = por %p153, %p154
      %p156 = scmp.ne.s32.totalorder %s148, %s150
      %p157 = scmp.eq.s32.totalorder %s25, 1
      %p158 = por %p156, %p157
      %p159 = scmp.ne.s32.totalorder %s150, %s151
      %p160 = scmp.eq.s32.totalorder %s25, 0
      %p161 = por %p159, %p160
      %p162 = scmp.ne.s32.totalorder %s150, %s151
      %p163 = scmp.eq.s32.totalorder %s26, 1
      %p164 = por %p162, %p163
      %p166 = scmp.ne.s32.totalorder %s151, %s165
      %p167 = scmp.eq.s32.totalorder %s26, 0
      %p168 = por %p166, %p167
      %s170 = sadd.s32 %s169, 1
      %p173 = scmp.eq.s32.totalorder %s20, 1
      %p174 = scmp.ne.s32.totalorder %s169, %s171
      %p175 = scmp.eq.s32.totalorder %s20, 0
      %p176 = por %p174, %p175
      %p177 = scmp.ne.s32.totalorder %s169, %s171
      %p178 = scmp.eq.s32.totalorder %s25, 1
      %p179 = por %p177, %p178
      %p180 = scmp.ne.s32.totalorder %s171, %s172
      %p181 = scmp.eq.s32.totalorder %s25, 0
      %p182 = por %p180, %p181
      %p183 = scmp.ne.s32.totalorder %s171, %s172
      %p184 = scmp.eq.s32.totalorder %s26, 1
      %p185 = por %p183, %p184
      %p187 = scmp.ne.s32.totalorder %s172, %s186
      %p188 = scmp.eq.s32.totalorder %s26, 0
      %p189 = por %p187, %p188
      %s190 = ssub.s32 %s20, %s27
      %p191 = scmp.eq.s32.totalorder %s190, 0
      %s193 = sadd.s32 %s192, 1
      %s194 = scalar_select %p191, %s192, %s193
      %p197 = pneg %p191
      %p198 = scmp.eq.s32.totalorder %s20, 1
      %p199 = por %p197, %p198
      %p200 = scmp.ne.s32.totalorder %s192, %s195
      %p201 = scmp.eq.s32.totalorder %s20, 0
      %p202 = por %p200, %p201
      %p203 = scmp.ne.s32.totalorder %s192, %s195
      %p204 = scmp.eq.s32.totalorder %s25, 1
      %p205 = por %p203, %p204
      %p206 = scmp.ne.s32.totalorder %s195, %s196
      %p207 = scmp.eq.s32.totalorder %s25, 0
      %p208 = por %p206, %p207
      %p209 = scmp.ne.s32.totalorder %s195, %s196
      %p210 = scmp.eq.s32.totalorder %s26, 1
      %p211 = por %p209, %p210
      %p213 = scmp.ne.s32.totalorder %s196, %s212
      %p214 = scmp.eq.s32.totalorder %s26, 0
      %p215 = por %p213, %p214
      %p216 = scmp.le.s32.totalorder 1, %s20
      %p217 = scmp.lt.s32.totalorder %s20, 3
      %p218 = pnand %p216, %p217
      %p219 = pneg %p218
      // Predicated region
      $region9: #{tpu_custom_call.1} parent=5 // pred_check
        _
      $region10: #{tpu_custom_call.1} parent=5 // pred_check_branch
        %221 = sbr.rel (%p218) target = $region12
      $region11: #{tpu_custom_call.1} parent=5 // pred_region
        %s222 = ssub.s32 %s20, 1
        // Predicated region
        $region13: #{tpu_custom_call.1} parent=11 // pred_check
          %p223 = pneg %p119
        $region14: #{tpu_custom_call.1} parent=11 // pred_check_branch
          %225 = sbr.rel (%p223) target = $region16
        $region15: #{tpu_custom_call.1} parent=11 // pred_region
          %227 = vsyncadd [#allocation8], 0
          %s228 = sshll.u32 %s3, 4
          %s229 = int_to_ptr.hbm [resolvable:$true] %s228
          %s230 = sshll.u32 [#allocation7], 4
          %s231 = int_to_ptr.vmem [resolvable:$true] %s230
          %236 = dma.hbm_to_vmem [thread:$0]  %s229, 2048, %s231, [#allocation8], 128, 128, 8
        $region16: #{tpu_custom_call.1} parent=11 // pred_fallthru
          _
        // Predicated region
        $region17: #{tpu_custom_call.1} parent=11 // pred_check
          %p237 = pneg %p140
        $region18: #{tpu_custom_call.1} parent=11 // pred_check_branch
          %239 = sbr.rel (%p237) target = $region20
        $region19: #{tpu_custom_call.1} parent=11 // pred_region
          _
        $region20: #{tpu_custom_call.1} parent=11 // pred_fallthru
          _
        // Predicated region
        $region21: #{tpu_custom_call.1} parent=11 // pred_check
          %p240 = pneg %p161
        $region22: #{tpu_custom_call.1} parent=11 // pred_check_branch
          %242 = sbr.rel (%p240) target = $region24
        $region23: #{tpu_custom_call.1} parent=11 // pred_region
          %244 = vsyncadd [#allocation8], 0
          %s245 = sshll.u32 %s5, 4
          %s246 = int_to_ptr.hbm [resolvable:$true] %s245
          %s247 = sshll.u32 [#allocation9], 4
          %s248 = int_to_ptr.vmem [resolvable:$true] %s247
          %253 = dma.hbm_to_vmem [thread:$0]  %s246, 2048, %s248, [#allocation8], 128, 128, 8
        $region24: #{tpu_custom_call.1} parent=11 // pred_fallthru
          _
        // Predicated region
        $region25: #{tpu_custom_call.1} parent=11 // pred_check
          %p254 = pneg %p182
        $region26: #{tpu_custom_call.1} parent=11 // pred_check_branch
          %256 = sbr.rel (%p254) target = $region28
        $region27: #{tpu_custom_call.1} parent=11 // pred_region
          _
        $region28: #{tpu_custom_call.1} parent=11 // pred_fallthru
          _
      $region12: #{tpu_custom_call.1} parent=5 // pred_fallthru
        _
      %p257 = scmp.lt.s32.totalorder %s20, 2
      // Predicated region
      $region29: #{tpu_custom_call.1} parent=5 // pred_check
        %p258 = pneg %p257
      $region30: #{tpu_custom_call.1} parent=5 // pred_check_branch
        %260 = sbr.rel (%p258) target = $region32
      $region31: #{tpu_custom_call.1} parent=5 // pred_region
        // Predicated region
        $region33: #{tpu_custom_call.1} parent=31 // pred_check
          %p261 = pneg %p40
        $region34: #{tpu_custom_call.1} parent=31 // pred_check_branch
          %263 = sbr.rel (%p261) target = $region36
        $region35: #{tpu_custom_call.1} parent=31 // pred_region
          %s264 = sand.u32 %s30, 1
          %s265 = scalar_lea.sflag [#allocation3], %s264
          %s266 = sand.u32 %s30, 1
          %s267 = smul.addr %s266, 24
          %s268 = scalar_lea.vmem [#allocation2], %s267
          %s269 = smul.u32 3, %s20
          %271 = vsyncadd %s265, 0
          %s272 = smul.addr %s269, 8
          %s273 = scalar_lea.hbm %s0, %s272
          %s274 = sshll.u32 %s273, 4
          %s275 = int_to_ptr.hbm [resolvable:$true] %s274
          %s276 = sshll.u32 %s268, 4
          %s277 = int_to_ptr.vmem [resolvable:$true] %s276
          %282 = dma.hbm_to_vmem [thread:$0]  %s275, 384, %s277, %s265, 128, 128, 8
        $region36: #{tpu_custom_call.1} parent=31 // pred_fallthru
          _
        // Predicated region
        $region37: #{tpu_custom_call.1} parent=31 // pred_check
          %p283 = pneg %p66
        $region38: #{tpu_custom_call.1} parent=31 // pred_check_branch
          %285 = sbr.rel (%p283) target = $region40
        $region39: #{tpu_custom_call.1} parent=31 // pred_region
          %s286 = sand.u32 %s20, 1
          %s287 = scalar_lea.sflag [#allocation5], %s286
          %s288 = sand.u32 %s56, 1
          %s289 = smul.addr %s288, 24
          %s290 = scalar_lea.vmem [#allocation4], %s289
          %s291 = smul.u32 3, %s20
          %293 = vsyncadd %s287, 0
          %s294 = smul.addr %s291, 8
          %s295 = scalar_lea.hbm %s1, %s294
          %s296 = sshll.u32 %s295, 4
          %s297 = int_to_ptr.hbm [resolvable:$true] %s296
          %s298 = sshll.u32 %s290, 4
          %s299 = int_to_ptr.vmem [resolvable:$true] %s298
          %304 = dma.hbm_to_vmem [thread:$0]  %s297, 384, %s299, %s287, 128, 128, 8
        $region40: #{tpu_custom_call.1} parent=31 // pred_fallthru
          _
        // Predicated region
        $region41: #{tpu_custom_call.1} parent=31 // pred_check
          %p305 = pneg %p92
        $region42: #{tpu_custom_call.1} parent=31 // pred_check_branch
          %307 = sbr.rel (%p305) target = $region44
        $region43: #{tpu_custom_call.1} parent=31 // pred_region
          %s308 = sand.u32 %s20, 1
          %s309 = scalar_lea.sflag [#allocation5], %s308
          %s310 = sand.u32 %s82, 1
          %s311 = smul.addr %s310, 24
          %s312 = scalar_lea.vmem [#allocation6], %s311
          %s313 = smul.u32 3, %s20
          %315 = vsyncadd %s309, 0
          %s316 = smul.addr %s313, 8
          %s317 = scalar_lea.hbm %s2, %s316
          %s318 = sshll.u32 %s317, 4
          %s319 = int_to_ptr.hbm [resolvable:$true] %s318
          %s320 = sshll.u32 %s312, 4
          %s321 = int_to_ptr.vmem [resolvable:$true] %s320
          %326 = dma.hbm_to_vmem [thread:$0]  %s319, 384, %s321, %s309, 128, 128, 8
        $region44: #{tpu_custom_call.1} parent=31 // pred_fallthru
          _
      $region32: #{tpu_custom_call.1} parent=5 // pred_fallthru
        _
      %p327 = scmp.le.s32.totalorder 1, %s20
      %p328 = scmp.lt.s32.totalorder %s20, 3
      %p329 = pnand %p327, %p328
      %p330 = pneg %p329
      // Predicated region
      $region45: #{tpu_custom_call.1} parent=5 // pred_check
        _
      $region46: #{tpu_custom_call.1} parent=5 // pred_check_branch
        %332 = sbr.rel (%p329) target = $region48
      $region47: #{tpu_custom_call.1} parent=5 // pred_region
        %s333 = ssub.s32 %s20, 1
        %s334 = sand.u32 %s33, 1
        %s335 = scalar_lea.sflag [#allocation3], %s334
        %s336 = sand.u32 %s33, 1
        %s337 = smul.addr %s336, 24
        %s338 = scalar_lea.vmem [#allocation2], %s337
        // Predicated region
        $region49: #{tpu_custom_call.1} parent=47 // pred_check
          %p339 = pneg %p46
        $region50: #{tpu_custom_call.1} parent=47 // pred_check_branch
          %341 = sbr.rel (%p339) target = $region52
        $region51: #{tpu_custom_call.1} parent=47 // pred_region
          %343 = dma.done %s335, 384
        $region52: #{tpu_custom_call.1} parent=47 // pred_fallthru
          _
        %s344 = sand.u32 %s25, 1
        %s345 = scalar_lea.sflag [#allocation5], %s344
        %s346 = sand.u32 %s59, 1
        %s347 = smul.addr %s346, 24
        %s348 = scalar_lea.vmem [#allocation4], %s347
        // Predicated region
        $region53: #{tpu_custom_call.1} parent=47 // pred_check
          %p349 = pneg %p72
        $region54: #{tpu_custom_call.1} parent=47 // pred_check_branch
          %351 = sbr.rel (%p349) target = $region56
        $region55: #{tpu_custom_call.1} parent=47 // pred_region
          %353 = dma.done %s345, 384
        $region56: #{tpu_custom_call.1} parent=47 // pred_fallthru
          _
        %s354 = sand.u32 %s25, 1
        %s355 = scalar_lea.sflag [#allocation5], %s354
        %s356 = sand.u32 %s85, 1
        %s357 = smul.addr %s356, 24
        %s358 = scalar_lea.vmem [#allocation6], %s357
        // Predicated region
        $region57: #{tpu_custom_call.1} parent=47 // pred_check
          %p359 = pneg %p98
        $region58: #{tpu_custom_call.1} parent=47 // pred_check_branch
          %361 = sbr.rel (%p359) target = $region60
        $region59: #{tpu_custom_call.1} parent=47 // pred_region
          %363 = dma.done %s355, 384
        $region60: #{tpu_custom_call.1} parent=47 // pred_fallthru
          _
        // Predicated region
        $region61: #{tpu_custom_call.1} parent=47 // pred_check
          %p364 = pneg %p119
        $region62: #{tpu_custom_call.1} parent=47 // pred_check_branch
          %366 = sbr.rel (%p364) target = $region64
        $region63: #{tpu_custom_call.1} parent=47 // pred_region
          %368 = dma.done [#allocation8], 2048
        $region64: #{tpu_custom_call.1} parent=47 // pred_fallthru
          _
        // Predicated region
        $region65: #{tpu_custom_call.1} parent=47 // pred_check
          %p369 = pneg %p161
        $region66: #{tpu_custom_call.1} parent=47 // pred_check_branch
          %371 = sbr.rel (%p369) target = $region68
        $region67: #{tpu_custom_call.1} parent=47 // pred_region
          %373 = dma.done [#allocation8], 2048
        $region68: #{tpu_custom_call.1} parent=47 // pred_fallthru
          _
        %s374 = sand.u32 %s33, 1
        %s375 = scalar_lea.sflag [#allocation3], %s374
        %s376 = sand.u32 %s33, 1
        %s377 = smul.addr %s376, 24
        %s378 = scalar_lea.vmem [#allocation2], %s377
        %p379 = pneg %p46
        %p380 = pneg %p43
        %s381 = sand.u32 %s25, 1
        %s382 = scalar_lea.sflag [#allocation5], %s381
        %s383 = sand.u32 %s59, 1
        %s384 = smul.addr %s383, 24
        %s385 = scalar_lea.vmem [#allocation4], %s384
        %p386 = pneg %p72
        %p387 = pneg %p69
        %s388 = sand.u32 %s25, 1
        %s389 = scalar_lea.sflag [#allocation5], %s388
        %s390 = sand.u32 %s85, 1
        %s391 = smul.addr %s390, 24
        %s392 = scalar_lea.vmem [#allocation6], %s391
        %p393 = pneg %p98
        %p394 = pneg %p95
        %p395 = pneg %p119
        %p396 = pneg %p116
        %p397 = pneg %p140
        %p398 = pneg %p137
        %p399 = pneg %p161
        %p400 = pneg %p158
        %p401 = pneg %p182
        %p402 = pneg %p179
        %p403 = pneg %p208
        %p404 = pneg %p205
        %p405 = scmp.lt.s32.totalorder %s25, 1
        %s406 = scalar_select %p405, %s25, 1
        %s407 = scalar_lea.vmem %s7, %s406
        %s408 = smul.u32 3, %s25
        %s409 = smul.u32 3, %s25
        %s410 = smul.u32 3, %s25
        %p411 = scmp.lt.s32.totalorder %s25, 1
        %s412 = scalar_select %p411, %s25, 1
        %s413 = scalar_lea.vmem %s7, %s412
        %v414 = vld [vmem:[%s338] sm:$0xff]
        %v415 = vld [vmem:[%s338 + $0x8] sm:$0xff]
        %v416 = vld [vmem:[%s338 + $0x10] sm:$0xff]
        %v417 = vld [vmem:[%s348] sm:$0xff]
        %v418 = vld [vmem:[%s348 + $0x8] sm:$0xff]
        %v419 = vld [vmem:[%s348 + $0x10] sm:$0xff]
        %v420 = vld [vmem:[%s358] sm:$0xff]
        %v421 = vld [vmem:[%s358 + $0x8] sm:$0xff]
        %v422 = vld [vmem:[%s358 + $0x10] sm:$0xff]
        %v423 = vld [vmem:[#allocation7] sm:$0xff]
        %v424 = vld [vmem:[#allocation7 + $0x8] sm:$0xff]
        %v425 = vld [vmem:[#allocation7 + $0x10] sm:$0xff]
        %v426 = vld [vmem:[#allocation7 + $0x18] sm:$0xff]
        %v427 = vld [vmem:[#allocation7 + $0x20] sm:$0xff]
        %v428 = vld [vmem:[#allocation7 + $0x28] sm:$0xff]
        %v429 = vld [vmem:[#allocation7 + $0x30] sm:$0xff]
        %v430 = vld [vmem:[#allocation7 + $0x38] sm:$0xff]
        %v431 = vld [vmem:[#allocation7 + $0x40] sm:$0xff]
        %v432 = vld [vmem:[#allocation7 + $0x48] sm:$0xff]
        %v433 = vld [vmem:[#allocation7 + $0x50] sm:$0xff]
        %v434 = vld [vmem:[#allocation7 + $0x58] sm:$0xff]
        %v435 = vld [vmem:[#allocation7 + $0x60] sm:$0xff]
        %v436 = vld [vmem:[#allocation7 + $0x68] sm:$0xff]
        %v437 = vld [vmem:[#allocation7 + $0x70] sm:$0xff]
        %v438 = vld [vmem:[#allocation7 + $0x78] sm:$0xff]
        %v439 = vld [vmem:[%s4] sm:$0x1]
        %v441 = vperm.slane %v439, 0
        %443 = vmatpush.msra.mxu0 %v438
        %444 = vmatpush.msra.mxu0 %v437
        %445 = vmatpush.msra.mxu0 %v436
        %446 = vmatpush.msra.mxu0 %v435
        %447 = vmatpush.msra.mxu0 %v434
        %448 = vmatpush.msra.mxu0 %v433
        %449 = vmatpush.msra.mxu0 %v432
        %450 = vmatpush.msra.mxu0 %v431
        %451 = vmatpush.msra.mxu0 %v430
        %452 = vmatpush.msra.mxu0 %v429
        %453 = vmatpush.msra.mxu0 %v428
        %454 = vmatpush.msra.mxu0 %v427
        %455 = vmatpush.msra.mxu0 %v426
        %456 = vmatpush.msra.mxu0 %v425
        %457 = vmatpush.msra.mxu0 %v424
        %458 = vmatpush.msra.mxu0 %v423
        %459 = vmatmul.f32.gmra.mxu0 %v414
        %v460 = vpop.f32.mrf.mxu0
        %v461 = vadd.f32 %v441, %v460
        %462 = vmatmul.f32.gmra.mxu0 %v415
        %v463 = vpop.f32.mrf.mxu0
        %v464 = vadd.f32 %v441, %v463
        %465 = vmatmul.f32.gmra.mxu0 %v416
        %v466 = vpop.f32.mrf.mxu0
        %v467 = vadd.f32 %v441, %v466
        %468 = vmatmul.f32.gmra.mxu0 %v417
        %v469 = vpop.f32.mrf.mxu0
        %v470 = vadd.f32 %v441, %v469
        %471 = vmatmul.f32.gmra.mxu0 %v418
        %v472 = vpop.f32.mrf.mxu0
        %v473 = vadd.f32 %v441, %v472
        %474 = vmatmul.f32.gmra.mxu0 %v419
        %v475 = vpop.f32.mrf.mxu0
        %v476 = vadd.f32 %v441, %v475
        %477 = vmatmul.f32.gmra.mxu0 %v420
        %v478 = vpop.f32.mrf.mxu0
        %v479 = vadd.f32 %v441, %v478
        %480 = vmatmul.f32.gmra.mxu0 %v421
        %v481 = vpop.f32.mrf.mxu0
        %v482 = vadd.f32 %v441, %v481
        %483 = vmatmul.f32.gmra.mxu0 %v422
        %v484 = vpop.f32.mrf.mxu0
        %v485 = vadd.f32 %v441, %v484
        %486 = vdwg.mxu0
        %v487 = vmax.f32 %v461, 0.0
        %v488 = vmax.f32 %v464, 0.0
        %v489 = vmax.f32 %v467, 0.0
        %v490 = vmax.f32 %v470, 0.0
        %v491 = vmax.f32 %v473, 0.0
        %v492 = vmax.f32 %v476, 0.0
        %v493 = vmax.f32 %v479, 0.0
        %v494 = vmax.f32 %v482, 0.0
        %v495 = vmax.f32 %v485, 0.0
        %v496 = vld [vmem:[#allocation9] sm:$0xff]
        %v497 = vld [vmem:[#allocation9 + $0x8] sm:$0xff]
        %v498 = vld [vmem:[#allocation9 + $0x10] sm:$0xff]
        %v499 = vld [vmem:[#allocation9 + $0x18] sm:$0xff]
        %v500 = vld [vmem:[#allocation9 + $0x20] sm:$0xff]
        %v501 = vld [vmem:[#allocation9 + $0x28] sm:$0xff]
        %v502 = vld [vmem:[#allocation9 + $0x30] sm:$0xff]
        %v503 = vld [vmem:[#allocation9 + $0x38] sm:$0xff]
        %v504 = vld [vmem:[#allocation9 + $0x40] sm:$0xff]
        %v505 = vld [vmem:[#allocation9 + $0x48] sm:$0xff]
        %v506 = vld [vmem:[#allocation9 + $0x50] sm:$0xff]
        %v507 = vld [vmem:[#allocation9 + $0x58] sm:$0xff]
        %v508 = vld [vmem:[#allocation9 + $0x60] sm:$0xff]
        %v509 = vld [vmem:[#allocation9 + $0x68] sm:$0xff]
        %v510 = vld [vmem:[#allocation9 + $0x70] sm:$0xff]
        %v511 = vld [vmem:[#allocation9 + $0x78] sm:$0xff]
        %v512 = vld [vmem:[%s6] sm:$0x1]
        %v514 = vperm.slane %v512, 0
        %516 = vmatpush.msra.mxu0 %v511
        %517 = vmatpush.msra.mxu0 %v510
        %518 = vmatpush.msra.mxu0 %v509
        %519 = vmatpush.msra.mxu0 %v508
        %520 = vmatpush.msra.mxu0 %v507
        %521 = vmatpush.msra.mxu0 %v506
        %522 = vmatpush.msra.mxu0 %v505
        %523 = vmatpush.msra.mxu0 %v504
        %524 = vmatpush.msra.mxu0 %v503
        %525 = vmatpush.msra.mxu0 %v502
        %526 = vmatpush.msra.mxu0 %v501
        %527 = vmatpush.msra.mxu0 %v500
        %528 = vmatpush.msra.mxu0 %v499
        %529 = vmatpush.msra.mxu0 %v498
        %530 = vmatpush.msra.mxu0 %v497
        %531 = vmatpush.msra.mxu0 %v496
        %532 = vmatmul.f32.gmra.mxu0 %v487
        %v533 = vpop.f32.mrf.mxu0
        %v534 = vadd.f32 %v514, %v533
        %535 = vmatmul.f32.gmra.mxu0 %v488
        %v536 = vpop.f32.mrf.mxu0
        %v537 = vadd.f32 %v514, %v536
        %538 = vmatmul.f32.gmra.mxu0 %v489
        %v539 = vpop.f32.mrf.mxu0
        %v540 = vadd.f32 %v514, %v539
        %541 = vmatmul.f32.gmra.mxu0 %v490
        %v542 = vpop.f32.mrf.mxu0
        %v543 = vadd.f32 %v514, %v542
        %544 = vmatmul.f32.gmra.mxu0 %v491
        %v545 = vpop.f32.mrf.mxu0
        %v546 = vadd.f32 %v514, %v545
        %547 = vmatmul.f32.gmra.mxu0 %v492
        %v548 = vpop.f32.mrf.mxu0
        %v549 = vadd.f32 %v514, %v548
        %550 = vmatmul.f32.gmra.mxu0 %v493
        %v551 = vpop.f32.mrf.mxu0
        %v552 = vadd.f32 %v514, %v551
        %553 = vmatmul.f32.gmra.mxu0 %v494
        %v554 = vpop.f32.mrf.mxu0
        %v555 = vadd.f32 %v514, %v554
        %556 = vmatmul.f32.gmra.mxu0 %v495
        %v557 = vpop.f32.mrf.mxu0
        %v558 = vadd.f32 %v514, %v557
        %559 = vdwg.mxu0
        %v560 = vsub.f32 %v534, %v543
        %v561 = vsub.f32 %v537, %v546
        %v562 = vsub.f32 %v540, %v549
        %v563 = vadd.f32 %v560, 1e-06
        %v564 = vadd.f32 %v561, 1e-06
        %v565 = vadd.f32 %v562, 1e-06
        %v566 = vmul.f32 %v563, %v563
        %v567 = vmul.f32 %v564, %v564
        %v568 = vmul.f32 %v565, %v565
        %569 = vadd.xlane.f32.xlu0 %v566
        %v570 = vpop.xlane.xlu0 %569
        %571 = vadd.xlane.f32.xlu0 %v567
        %v572 = vpop.xlane.xlu0 %571
        %573 = vadd.xlane.f32.xlu0 %v568
        %v574 = vpop.xlane.xlu0 %573
        %v575 = vrsqrt.pop %v570
        %v576 = vmul.f32 %v575, %v570
        %v577 = vmul.f32 %v576, %v575
        %v578 = vmul.f32 0.5, %v577
        %v579 = vsub.f32 1.5, %v578
        %v580 = vmul.f32 %v575, %v579
        %v581 = vmul.f32 %v570, %v580
        %vm582 = vcmp.eq.f32.partialorder %v570, inf
        %v583 = vsel %vm582, %v570, %v581
        %vm584 = vcmp.eq.f32.partialorder %v570, 0.0
        %v585 = vand.u32 %v570, 2147483648
        %v586 = vsel %vm584, %v585, %v583
        %v587 = vrsqrt.pop %v572
        %v588 = vmul.f32 %v587, %v572
        %v589 = vmul.f32 %v588, %v587
        %v590 = vmul.f32 0.5, %v589
        %v591 = vsub.f32 1.5, %v590
        %v592 = vmul.f32 %v587, %v591
        %v593 = vmul.f32 %v572, %v592
        %vm594 = vcmp.eq.f32.partialorder %v572, inf
        %v595 = vsel %vm594, %v572, %v593
        %vm596 = vcmp.eq.f32.partialorder %v572, 0.0
        %v597 = vand.u32 %v572, 2147483648
        %v598 = vsel %vm596, %v597, %v595
        %v599 = vrsqrt.pop %v574
        %v600 = vmul.f32 %v599, %v574
        %v601 = vmul.f32 %v600, %v599
        %v602 = vmul.f32 0.5, %v601
        %v603 = vsub.f32 1.5, %v602
        %v604 = vmul.f32 %v599, %v603
        %v605 = vmul.f32 %v574, %v604
        %vm606 = vcmp.eq.f32.partialorder %v574, inf
        %v607 = vsel %vm606, %v574, %v605
        %vm608 = vcmp.eq.f32.partialorder %v574, 0.0
        %v609 = vand.u32 %v574, 2147483648
        %v610 = vsel %vm608, %v609, %v607
        %v611 = vsub.f32 %v534, %v552
        %v612 = vsub.f32 %v537, %v555
        %v613 = vsub.f32 %v540, %v558
        %v614 = vadd.f32 %v611, 1e-06
        %v615 = vadd.f32 %v612, 1e-06
        %v616 = vadd.f32 %v613, 1e-06
        %v617 = vmul.f32 %v614, %v614
        %v618 = vmul.f32 %v615, %v615
        %v619 = vmul.f32 %v616, %v616
        %620 = vadd.xlane.f32.xlu0 %v617
        %v621 = vpop.xlane.xlu0 %620
        %622 = vadd.xlane.f32.xlu0 %v618
        %v623 = vpop.xlane.xlu0 %622
        %624 = vadd.xlane.f32.xlu0 %v619
        %v625 = vpop.xlane.xlu0 %624
        %v626 = vrsqrt.pop %v621
        %v627 = vmul.f32 %v626, %v621
        %v628 = vmul.f32 %v627, %v626
        %v629 = vmul.f32 0.5, %v628
        %v630 = vsub.f32 1.5, %v629
        %v631 = vmul.f32 %v626, %v630
        %v632 = vmul.f32 %v621, %v631
        %vm633 = vcmp.eq.f32.partialorder %v621, inf
        %v634 = vsel %vm633, %v621, %v632
        %vm635 = vcmp.eq.f32.partialorder %v621, 0.0
        %v636 = vand.u32 %v621, 2147483648
        %v637 = vsel %vm635, %v636, %v634
        %v638 = vrsqrt.pop %v623
        %v639 = vmul.f32 %v638, %v623
        %v640 = vmul.f32 %v639, %v638
        %v641 = vmul.f32 0.5, %v640
        %v642 = vsub.f32 1.5, %v641
        %v643 = vmul.f32 %v638, %v642
        %v644 = vmul.f32 %v623, %v643
        %vm645 = vcmp.eq.f32.partialorder %v623, inf
        %v646 = vsel %vm645, %v623, %v644
        %vm647 = vcmp.eq.f32.partialorder %v623, 0.0
        %v648 = vand.u32 %v623, 2147483648
        %v649 = vsel %vm647, %v648, %v646
        %v650 = vrsqrt.pop %v625
        %v651 = vmul.f32 %v650, %v625
        %v652 = vmul.f32 %v651, %v650
        %v653 = vmul.f32 0.5, %v652
        %v654 = vsub.f32 1.5, %v653
        %v655 = vmul.f32 %v650, %v654
        %v656 = vmul.f32 %v625, %v655
        %vm657 = vcmp.eq.f32.partialorder %v625, inf
        %v658 = vsel %vm657, %v625, %v656
        %vm659 = vcmp.eq.f32.partialorder %v625, 0.0
        %v660 = vand.u32 %v625, 2147483648
        %v661 = vsel %vm659, %v660, %v658
        %v662 = vsub.f32 %v586, %v637
        %v663 = vsub.f32 %v598, %v649
        %v664 = vsub.f32 %v610, %v661
        %v665 = vadd.f32 %v662, 1.0
        %v666 = vadd.f32 %v663, 1.0
        %v667 = vadd.f32 %v664, 1.0
        %v668 = vmax.f32 %v665, 0.0
        %v669 = vmax.f32 %v666, 0.0
        %v670 = vmax.f32 %v667, 0.0
        %s671 = smul.u32 %s25, 24
        %v672 = vlaneseq
        %v673 = vshrl.u32 %v672, 7
        %v674 = vadd.s32 %v673, 8
        %v675 = vadd.s32 %v673, 16
        %v676 = vstv %s671
        %v677 = vadd.s32 %v676, %v673
        %v678 = vadd.s32 %v676, %v674
        %v679 = vadd.s32 %v676, %v675
        %vm680 = vcmp.lt.s32.totalorder %v677, 48
        %vm681 = vcmp.lt.s32.totalorder %v678, 48
        %vm682 = vcmp.lt.s32.totalorder %v679, 48
        %v683 = vsel %vm680, %v668, 0.0
        %v684 = vsel %vm681, %v669, 0.0
        %v685 = vsel %vm682, %v670, 0.0
        %v686 = vadd.f32 %v683, %v684
        %v687 = vadd.f32 %v686, %v685
        %v688 = vrot.slane %v687, 4
        %v689 = vadd.f32 %v687, %v688
        %v690 = vrot.slane %v689, 2
        %v691 = vadd.f32 %v689, %v690
        %v692 = vrot.slane %v691, 1
        %v693 = vadd.f32 %v691, %v692
        %vm694 = vcmask 0
        %695 = vst.msk [vmem:[%s413] sm:$0x1] %vm694, %v693
        %p696 = scmp.lt.s32.totalorder %s25, 1
        %s697 = scalar_select %p696, %s25, 1
        %s698 = scalar_lea.vmem %s7, %s697
        // Predicated region
        $region69: #{tpu_custom_call.1} parent=47 // pred_check
          %p699 = pneg %p205
        $region70: #{tpu_custom_call.1} parent=47 // pred_check_branch
          %701 = sbr.rel (%p699) target = $region72
        $region71: #{tpu_custom_call.1} parent=47 // pred_region
          _
        $region72: #{tpu_custom_call.1} parent=47 // pred_fallthru
          _
      $region48: #{tpu_custom_call.1} parent=5 // pred_fallthru
        _
      %p702 = scmp.le.s32.totalorder 2, %s20
      // Predicated region
      $region73: #{tpu_custom_call.1} parent=5 // pred_check
        %p703 = pneg %p702
      $region74: #{tpu_custom_call.1} parent=5 // pred_check_branch
        %705 = sbr.rel (%p703) target = $region76
      $region75: #{tpu_custom_call.1} parent=5 // pred_region
        %s706 = ssub.s32 %s20, 2
        // Predicated region
        $region77: #{tpu_custom_call.1} parent=75 // pred_check
          %p707 = pneg %p211
        $region78: #{tpu_custom_call.1} parent=75 // pred_check_branch
          %709 = sbr.rel (%p707) target = $region80
        $region79: #{tpu_custom_call.1} parent=75 // pred_region
          %p710 = scmp.lt.s32.totalorder %s26, 1
          %s711 = scalar_select %p710, %s26, 1
          %s712 = scalar_lea.vmem %s7, %s711
        $region80: #{tpu_custom_call.1} parent=75 // pred_fallthru
          _
      $region76: #{tpu_custom_call.1} parent=5 // pred_fallthru
        _
    $region6: #{tpu_custom_call.1} parent=1 // loop_footer
      %s24 = sadd.s32 1, %s20
    $region7: #{tpu_custom_call.1} parent=1 // loop_footer_branch
      %19 = sbr.rel target = $region3
    $region8: #{tpu_custom_call.1} parent=1 // loop_exit
      _
    %713 = vsyncpa [#allocation3], 1
    %s714 = scalar_lea.sflag [#allocation3], 1
    %715 = vsyncpa %s714, 1
    %716 = vsyncpa [#allocation5], 1
    %s717 = scalar_lea.sflag [#allocation5], 1
    %718 = vsyncpa %s717, 1
    %719 = vsyncpa [#allocation8], 1

</llo_original>
